<compile_context>
chip_gen: v6e
topology: v6e:2x2x1
jax: 0.10.0
libtpu: 0.0.40
codegen_flags: <defaults>
</compile_context>

<pallas_src>
import functools

import jax
import jax.numpy as jnp
from jax import lax
from jax.experimental import pallas as pl
from jax.experimental.pallas import tpu as pltpu


def _round_up(x, m):
    return (x + m - 1) // m * m


def _sepconv_kernel(x_ref, dw_ref, pw_ref, shift_ref, o_ref, *,
                    NB, KH, KW, Wp, Lpad, row_len, dilation, mxu_dtype):
    """Fused depthwise conv + pointwise conv + BN(affine) + ReLU for NB images.

    x_ref:     (NB, C, Lin)   flattened padded images
    dw_ref:    (C, KH*KW)     depthwise weights (one lane per tap)
    pw_ref:    (Co, C)        pointwise weights with BN scale pre-folded
    shift_ref: (Co, 1)        folded BN shift = beta - mean * scale
    o_ref:     (NB, Co, Lpad) lane-dense output slab (garbage cols stripped outside)
    """
    # Hoisted parameter loads (shared by every image / tap in this block).
    dw = dw_ref[...].astype(jnp.float32)        # (C, KH*KW) single tile
    pw = pw_ref[...].astype(mxu_dtype)          # (Co, C)
    shift = shift_ref[...].astype(jnp.float32)  # (Co, 1)

    for n in range(NB):                         # static unroll, NB is small
        acc = None
        for kh in range(KH):
            # One contiguous (misaligned-start) load per kernel row, reused by
            # all KW taps of that row via static in-register slices.
            base = kh * dilation * Wp           # static offset
            row = x_ref[n, :, pl.ds(base, row_len)].astype(jnp.float32)  # (C, row_len)
            for kw in range(KW):
                s = kw * dilation
                patch = row[:, s:s + Lpad]                       # (C, Lpad) static slice
                t = kh * KW + kw
                dcol = dw[:, t:t + 1]                            # (C, 1) lane-broadcast
                term = patch * dcol
                acc = term if acc is None else acc + term

        # Pointwise 1x1 conv on the MXU (BN scale already folded into pw).
        y = jnp.dot(pw, acc.astype(mxu_dtype),
                    preferred_element_type=jnp.float32)          # (Co, Lpad)
        y = y + shift                                            # BN shift
        y = jnp.maximum(y, 0.0)                                  # ReLU
        o_ref[n] = y.astype(o_ref.dtype)                         # dense, unmasked store


def separable_conv2d(x_nchw, dw_weight, pw_weight, gamma, beta,
                     running_mean, running_var, *,
                     stride=1, padding=0, dilation=1, eps=1e-5,
                     images_per_block=None, mxu_dtype=jnp.float32):
    """Forward pass of SeparableConv2d.  Inputs follow PyTorch conventions:

    x_nchw:    (N, C, H, W)
    dw_weight: (C, 1, KH, KW)   depthwise conv weight (groups = C, bias=False)
    pw_weight: (Co, C, 1, 1)    pointwise conv weight (bias=False)
    gamma/beta/running_mean/running_var: (Co,)  BatchNorm2d parameters
    """
    N, C, H, W = x_nchw.shape
    _, _, KH, KW = dw_weight.shape
    Co = pw_weight.shape[0]

    Hp, Wp = H + 2 * padding, W + 2 * padding
    # The kernel computes the stride-1 output grid; stride > 1 is handled by
    # subsampling in the wrapper (module default is stride=1).
    Ho1 = Hp - dilation * (KH - 1)
    Wo1 = Wp - dilation * (KW - 1)
    assert Ho1 >= 1 and Wo1 >= 1, "kernel larger than padded input"

    L = Ho1 * Wp                          # valid flattened output length
    Lpad = _round_up(L, 128)              # lane-dense slab (unmasked vst, aligned taps)
    row_len = Lpad + dilation * (KW - 1)  # one load per kh row covers all KW taps
    Lin = dilation * (KH - 1) * Wp + row_len
    tail = Lin - Hp * Wp                  # keeps the deepest tap read in-bounds
    assert tail >= 0

    # Images per grid step: amortize per-step overhead, but keep >= 2 grid
    # blocks (v7x has 2 TensorCores) when the batch allows it.
    if images_per_block is None:
        if N <= 1:
            NB = 1
        else:
            NB = max(d for d in range(1, N // 2 + 1) if N % d == 0)
    else:
        NB = images_per_block
        assert N % NB == 0, "images_per_block must divide N"
    G = N // NB

    # Glue (pure XLA): spatial zero-pad, flatten H*W, small weight/BN folds.
    x = jnp.pad(x_nchw, ((0, 0), (0, 0), (padding, padding), (padding, padding)))
    xf = x.reshape(N, C, Hp * Wp)
    if tail:
        xf = jnp.pad(xf, ((0, 0), (0, 0), (0, tail)))

    dw = dw_weight[:, 0].reshape(C, KH * KW)                       # (C, taps), one tile
    inv_std = 1.0 / jnp.sqrt(running_var.astype(jnp.float32) + eps)
    scale = gamma.astype(jnp.float32) * inv_std                    # (Co,)
    # Fold BN scale into the pointwise weight (exact: matmul is linear).
    pw = (pw_weight[:, :, 0, 0].astype(jnp.float32) * scale[:, None]).astype(mxu_dtype)
    shift = (beta.astype(jnp.float32)
             - running_mean.astype(jnp.float32) * scale).reshape(Co, 1)

    kernel = functools.partial(
        _sepconv_kernel, NB=NB, KH=KH, KW=KW, Wp=Wp, Lpad=Lpad,
        row_len=row_len, dilation=dilation, mxu_dtype=mxu_dtype)

    out_flat = pl.pallas_call(
        kernel,
        out_shape=jax.ShapeDtypeStruct((N, Co, Lpad), x_nchw.dtype),
        grid_spec=pltpu.PrefetchScalarGridSpec(
            num_scalar_prefetch=0,
            grid=(G,),
            in_specs=[
                pl.BlockSpec((NB, C, Lin), lambda b: (b, 0, 0)),
                pl.BlockSpec((C, KH * KW), lambda b: (0, 0)),
                pl.BlockSpec((Co, C), lambda b: (0, 0)),
                pl.BlockSpec((Co, 1), lambda b: (0, 0)),
            ],
            out_specs=pl.BlockSpec((NB, Co, Lpad), lambda b: (b, 0, 0)),
        ),
        compiler_params=pltpu.CompilerParams(
            dimension_semantics=("parallel",),
            vmem_limit_bytes=32 * 1024 * 1024),
    )(xf, dw, pw, shift)

    # Strip the lane pad and the per-row garbage columns (flat pitch Wp vs
    # valid width Wo1), then apply the conv stride.  Already NCHW.
    out = out_flat[:, :, :L].reshape(N, Co, Ho1, Wp)[:, :, :, :Wo1]
    if stride > 1:
        out = out[:, :, ::stride, ::stride]
    return out


def _reference(x, dw_weight, pw_weight, gamma, beta, mean, var,
               stride, padding, dilation, eps=1e-5):
    """Pure-JAX reference (mirrors the PyTorch ops) for correctness checking."""
    C = x.shape[1]
    y = lax.conv_general_dilated(
        x, dw_weight, window_strides=(stride, stride),
        padding=((padding, padding), (padding, padding)),
        rhs_dilation=(dilation, dilation), feature_group_count=C,
        dimension_numbers=("NCHW", "OIHW", "NCHW"))
    y = lax.conv_general_dilated(
        y, pw_weight, (1, 1), ((0, 0), (0, 0)),
        dimension_numbers=("NCHW", "OIHW", "NCHW"))
    s = gamma / jnp.sqrt(var + eps)
    y = y * s[None, :, None, None] + (beta - mean * s)[None, :, None, None]
    return jnp.maximum(y, 0.0)


if __name__ == "__main__":
    key = jax.random.PRNGKey(0)
    k_x, k_dw, k_pw, k_g, k_b, k_m, k_v = jax.random.split(key, 7)

    N, Cin, Cout, H, W = 4, 8, 16, 16, 16
    KH = KW = 3

    x = jax.random.normal(k_x, (N, Cin, H, W), jnp.float32)
    dw_weight = jax.random.normal(k_dw, (Cin, 1, KH, KW), jnp.float32) * 0.2
    pw_weight = jax.random.normal(k_pw, (Cout, Cin, 1, 1), jnp.float32) * 0.2
    gamma = jax.random.uniform(k_g, (Cout,), jnp.float32, 0.5, 1.5)
    beta = jax.random.normal(k_b, (Cout,), jnp.float32) * 0.1
    running_mean = jax.random.normal(k_m, (Cout,), jnp.float32) * 0.1
    running_var = jax.random.uniform(k_v, (Cout,), jnp.float32, 0.5, 1.5)

    # Config A: SeparableConv2d(8, 16, kernel_size=3, padding=1), f32 MXU path.
    out = jax.block_until_ready(
        separable_conv2d(x, dw_weight, pw_weight, gamma, beta,
                         running_mean, running_var,
                         stride=1, padding=1, dilation=1))
    ref = _reference(x, dw_weight, pw_weight, gamma, beta,
                     running_mean, running_var, 1, 1, 1)
    assert out.shape == (N, Cout, H, W), out.shape
    assert jnp.allclose(out, ref, atol=1e-4, rtol=1e-4), float(jnp.abs(out - ref).max())

    # Config B: the module's default constructor args (kernel_size=1, padding=0).
    dw1 = jax.random.normal(k_dw, (Cin, 1, 1, 1), jnp.float32) * 0.2
    out1 = jax.block_until_ready(
        separable_conv2d(x, dw1, pw_weight, gamma, beta, running_mean, running_var,
                         stride=1, padding=0, dilation=1))
    ref1 = _reference(x, dw1, pw_weight, gamma, beta, running_mean, running_var, 1, 0, 1)
    assert out1.shape == ref1.shape
    assert jnp.allclose(out1, ref1, atol=1e-4, rtol=1e-4), float(jnp.abs(out1 - ref1).max())

    # Config C: stride=2, dilation=2, padding=2 (exercises the general path).
    out2 = jax.block_until_ready(
        separable_conv2d(x, dw_weight, pw_weight, gamma, beta, running_mean, running_var,
                         stride=2, padding=2, dilation=2))
    ref2 = _reference(x, dw_weight, pw_weight, gamma, beta, running_mean, running_var, 2, 2, 2)
    assert out2.shape == ref2.shape, (out2.shape, ref2.shape)
    assert jnp.allclose(out2, ref2, atol=1e-4, rtol=1e-4), float(jnp.abs(out2 - ref2).max())

    # Config D: Config A with bf16 MXU operands (v6e/v7x fast path); f32 accumulate.
    out3 = jax.block_until_ready(
        separable_conv2d(x, dw_weight, pw_weight, gamma, beta, running_mean, running_var,
                         stride=1, padding=1, dilation=1, mxu_dtype=jnp.bfloat16))
    assert out3.shape == ref.shape
    assert jnp.allclose(out3, ref, atol=5e-2, rtol=5e-2), float(jnp.abs(out3 - ref).max())

    print("KERNEL_OK")
</pallas_src>

<mosaic_0001>
module attributes {stable_mosaic.version = 11 : i64} {
  func.func @_sepconv_kernel(%arg0: i32, %arg1: memref<2x8x422xf32, #tpu.memory_space<vmem>>, %arg2: memref<8x9xf32, #tpu.memory_space<vmem>>, %arg3: memref<16x8xf32, #tpu.memory_space<vmem>>, %arg4: memref<16x1xf32, #tpu.memory_space<vmem>>, %arg5: memref<2x16x384xf32, #tpu.memory_space<vmem>>) attributes {dimension_semantics = [#tpu.dimension_semantics<parallel>], iteration_bounds = array<i64: 2>, scalar_prefetch = 0 : i64, scratch_operands = 0 : i64, tpu.core_type = #tpu.core_type<tc>, window_params = [{transform_indices = @transform_0, window_bounds = array<i64: 2, 8, 422>}, {pipeline_mode = #tpu.pipeline_mode<synchronous>, transform_indices = @transform_1, window_bounds = array<i64: 8, 9>}, {pipeline_mode = #tpu.pipeline_mode<synchronous>, transform_indices = @transform_2, window_bounds = array<i64: 16, 8>}, {pipeline_mode = #tpu.pipeline_mode<synchronous>, transform_indices = @transform_3, window_bounds = array<i64: 16, 1>}, {transform_indices = @transform_4, window_bounds = array<i64: 2, 16, 384>}]} {
    %c0 = arith.constant 0 : index
    %c0_0 = arith.constant 0 : index
    %0 = vector.load %arg2[%c0, %c0_0] : memref<8x9xf32, #tpu.memory_space<vmem>>, vector<8x9xf32>
    %c0_1 = arith.constant 0 : index
    %c0_2 = arith.constant 0 : index
    %1 = vector.load %arg3[%c0_1, %c0_2] : memref<16x8xf32, #tpu.memory_space<vmem>>, vector<16x8xf32>
    %c0_3 = arith.constant 0 : index
    %c0_4 = arith.constant 0 : index
    %2 = vector.load %arg4[%c0_3, %c0_4] : memref<16x1xf32, #tpu.memory_space<vmem>>, vector<16x1xf32>
    %c0_5 = arith.constant 0 : index
    %c0_6 = arith.constant 0 : index
    %c0_7 = arith.constant 0 : index
    %3 = vector.load %arg1[%c0_5, %c0_6, %c0_7] : memref<2x8x422xf32, #tpu.memory_space<vmem>>, vector<1x8x386xf32>
    %4 = vector.shape_cast %3 : vector<1x8x386xf32> to vector<8x386xf32>
    %5 = vector.extract_strided_slice %4 {offsets = [0, 0], sizes = [8, 384], strides = [1, 1]} : vector<8x386xf32> to vector<8x384xf32>
    %6 = vector.extract_strided_slice %0 {offsets = [0, 0], sizes = [8, 1], strides = [1, 1]} : vector<8x9xf32> to vector<8x1xf32>
    %7 = vector.broadcast %6 : vector<8x1xf32> to vector<8x384xf32>
    %8 = arith.mulf %5, %7 : vector<8x384xf32>
    %9 = vector.extract_strided_slice %4 {offsets = [0, 1], sizes = [8, 384], strides = [1, 1]} : vector<8x386xf32> to vector<8x384xf32>
    %10 = vector.extract_strided_slice %0 {offsets = [0, 1], sizes = [8, 1], strides = [1, 1]} : vector<8x9xf32> to vector<8x1xf32>
    %11 = vector.broadcast %10 : vector<8x1xf32> to vector<8x384xf32>
    %12 = arith.mulf %9, %11 : vector<8x384xf32>
    %13 = arith.addf %8, %12 : vector<8x384xf32>
    %14 = vector.extract_strided_slice %4 {offsets = [0, 2], sizes = [8, 384], strides = [1, 1]} : vector<8x386xf32> to vector<8x384xf32>
    %15 = vector.extract_strided_slice %0 {offsets = [0, 2], sizes = [8, 1], strides = [1, 1]} : vector<8x9xf32> to vector<8x1xf32>
    %16 = vector.broadcast %15 : vector<8x1xf32> to vector<8x384xf32>
    %17 = arith.mulf %14, %16 : vector<8x384xf32>
    %18 = arith.addf %13, %17 : vector<8x384xf32>
    %c0_8 = arith.constant 0 : index
    %c0_9 = arith.constant 0 : index
    %c18 = arith.constant 18 : index
    %19 = vector.load %arg1[%c0_8, %c0_9, %c18] : memref<2x8x422xf32, #tpu.memory_space<vmem>>, vector<1x8x386xf32>
    %20 = vector.shape_cast %19 : vector<1x8x386xf32> to vector<8x386xf32>
    %21 = vector.extract_strided_slice %20 {offsets = [0, 0], sizes = [8, 384], strides = [1, 1]} : vector<8x386xf32> to vector<8x384xf32>
    %22 = vector.extract_strided_slice %0 {offsets = [0, 3], sizes = [8, 1], strides = [1, 1]} : vector<8x9xf32> to vector<8x1xf32>
    %23 = vector.broadcast %22 : vector<8x1xf32> to vector<8x384xf32>
    %24 = arith.mulf %21, %23 : vector<8x384xf32>
    %25 = arith.addf %18, %24 : vector<8x384xf32>
    %26 = vector.extract_strided_slice %20 {offsets = [0, 1], sizes = [8, 384], strides = [1, 1]} : vector<8x386xf32> to vector<8x384xf32>
    %27 = vector.extract_strided_slice %0 {offsets = [0, 4], sizes = [8, 1], strides = [1, 1]} : vector<8x9xf32> to vector<8x1xf32>
    %28 = vector.broadcast %27 : vector<8x1xf32> to vector<8x384xf32>
    %29 = arith.mulf %26, %28 : vector<8x384xf32>
    %30 = arith.addf %25, %29 : vector<8x384xf32>
    %31 = vector.extract_strided_slice %20 {offsets = [0, 2], sizes = [8, 384], strides = [1, 1]} : vector<8x386xf32> to vector<8x384xf32>
    %32 = vector.extract_strided_slice %0 {offsets = [0, 5], sizes = [8, 1], strides = [1, 1]} : vector<8x9xf32> to vector<8x1xf32>
    %33 = vector.broadcast %32 : vector<8x1xf32> to vector<8x384xf32>
    %34 = arith.mulf %31, %33 : vector<8x384xf32>
    %35 = arith.addf %30, %34 : vector<8x384xf32>
    %c0_10 = arith.constant 0 : index
    %c0_11 = arith.constant 0 : index
    %c36 = arith.constant 36 : index
    %36 = vector.load %arg1[%c0_10, %c0_11, %c36] : memref<2x8x422xf32, #tpu.memory_space<vmem>>, vector<1x8x386xf32>
    %37 = vector.shape_cast %36 : vector<1x8x386xf32> to vector<8x386xf32>
    %38 = vector.extract_strided_slice %37 {offsets = [0, 0], sizes = [8, 384], strides = [1, 1]} : vector<8x386xf32> to vector<8x384xf32>
    %39 = vector.extract_strided_slice %0 {offsets = [0, 6], sizes = [8, 1], strides = [1, 1]} : vector<8x9xf32> to vector<8x1xf32>
    %40 = vector.broadcast %39 : vector<8x1xf32> to vector<8x384xf32>
    %41 = arith.mulf %38, %40 : vector<8x384xf32>
    %42 = arith.addf %35, %41 : vector<8x384xf32>
    %43 = vector.extract_strided_slice %37 {offsets = [0, 1], sizes = [8, 384], strides = [1, 1]} : vector<8x386xf32> to vector<8x384xf32>
    %44 = vector.extract_strided_slice %0 {offsets = [0, 7], sizes = [8, 1], strides = [1, 1]} : vector<8x9xf32> to vector<8x1xf32>
    %45 = vector.broadcast %44 : vector<8x1xf32> to vector<8x384xf32>
    %46 = arith.mulf %43, %45 : vector<8x384xf32>
    %47 = arith.addf %42, %46 : vector<8x384xf32>
    %48 = vector.extract_strided_slice %37 {offsets = [0, 2], sizes = [8, 384], strides = [1, 1]} : vector<8x386xf32> to vector<8x384xf32>
    %49 = vector.extract_strided_slice %0 {offsets = [0, 8], sizes = [8, 1], strides = [1, 1]} : vector<8x9xf32> to vector<8x1xf32>
    %50 = vector.broadcast %49 : vector<8x1xf32> to vector<8x384xf32>
    %51 = arith.mulf %48, %50 : vector<8x384xf32>
    %52 = arith.addf %47, %51 : vector<8x384xf32>
    %cst = arith.constant dense<0.000000e+00> : vector<16x384xf32>
    %53 = tpu.matmul %1, %52, %cst {dimension_numbers = #tpu.dot_dimension_numbers<[1], [0], [0], [1], [0, 0, 1, 1], [], []>} : vector<16x8xf32>, vector<8x384xf32>, vector<16x384xf32> -> vector<16x384xf32>
    %54 = vector.broadcast %2 : vector<16x1xf32> to vector<16x384xf32>
    %55 = arith.addf %53, %54 : vector<16x384xf32>
    %cst_12 = arith.constant 0.000000e+00 : f32
    %56 = vector.broadcast %cst_12 : f32 to vector<16x384xf32>
    %57 = arith.maximumf %55, %56 : vector<16x384xf32>
    %c0_13 = arith.constant 0 : index
    %c0_14 = arith.constant 0 : index
    %c0_15 = arith.constant 0 : index
    %58 = vector.load %arg5[%c0_13, %c0_14, %c0_15] : memref<2x16x384xf32, #tpu.memory_space<vmem>>, vector<1x16x384xf32>
    %59 = vector.shape_cast %58 : vector<1x16x384xf32> to vector<16x384xf32>
    %60 = vector.shape_cast %57 : vector<16x384xf32> to vector<1x16x384xf32>
    tpu.vector_store %arg5[%c0_13, %c0_14, %c0_15], %60 {strides = array<i32>} : memref<2x16x384xf32, #tpu.memory_space<vmem>>, vector<1x16x384xf32>,
    %c1 = arith.constant 1 : index
    %c0_16 = arith.constant 0 : index
    %c0_17 = arith.constant 0 : index
    %61 = vector.load %arg1[%c1, %c0_16, %c0_17] : memref<2x8x422xf32, #tpu.memory_space<vmem>>, vector<1x8x386xf32>
    %62 = vector.shape_cast %61 : vector<1x8x386xf32> to vector<8x386xf32>
    %63 = vector.extract_strided_slice %62 {offsets = [0, 0], sizes = [8, 384], strides = [1, 1]} : vector<8x386xf32> to vector<8x384xf32>
    %64 = vector.extract_strided_slice %0 {offsets = [0, 0], sizes = [8, 1], strides = [1, 1]} : vector<8x9xf32> to vector<8x1xf32>
    %65 = vector.broadcast %64 : vector<8x1xf32> to vector<8x384xf32>
    %66 = arith.mulf %63, %65 : vector<8x384xf32>
    %67 = vector.extract_strided_slice %62 {offsets = [0, 1], sizes = [8, 384], strides = [1, 1]} : vector<8x386xf32> to vector<8x384xf32>
    %68 = vector.extract_strided_slice %0 {offsets = [0, 1], sizes = [8, 1], strides = [1, 1]} : vector<8x9xf32> to vector<8x1xf32>
    %69 = vector.broadcast %68 : vector<8x1xf32> to vector<8x384xf32>
    %70 = arith.mulf %67, %69 : vector<8x384xf32>
    %71 = arith.addf %66, %70 : vector<8x384xf32>
    %72 = vector.extract_strided_slice %62 {offsets = [0, 2], sizes = [8, 384], strides = [1, 1]} : vector<8x386xf32> to vector<8x384xf32>
    %73 = vector.extract_strided_slice %0 {offsets = [0, 2], sizes = [8, 1], strides = [1, 1]} : vector<8x9xf32> to vector<8x1xf32>
    %74 = vector.broadcast %73 : vector<8x1xf32> to vector<8x384xf32>
    %75 = arith.mulf %72, %74 : vector<8x384xf32>
    %76 = arith.addf %71, %75 : vector<8x384xf32>
    %c1_18 = arith.constant 1 : index
    %c0_19 = arith.constant 0 : index
    %c18_20 = arith.constant 18 : index
    %77 = vector.load %arg1[%c1_18, %c0_19, %c18_20] : memref<2x8x422xf32, #tpu.memory_space<vmem>>, vector<1x8x386xf32>
    %78 = vector.shape_cast %77 : vector<1x8x386xf32> to vector<8x386xf32>
    %79 = vector.extract_strided_slice %78 {offsets = [0, 0], sizes = [8, 384], strides = [1, 1]} : vector<8x386xf32> to vector<8x384xf32>
    %80 = vector.extract_strided_slice %0 {offsets = [0, 3], sizes = [8, 1], strides = [1, 1]} : vector<8x9xf32> to vector<8x1xf32>
    %81 = vector.broadcast %80 : vector<8x1xf32> to vector<8x384xf32>
    %82 = arith.mulf %79, %81 : vector<8x384xf32>
    %83 = arith.addf %76, %82 : vector<8x384xf32>
    %84 = vector.extract_strided_slice %78 {offsets = [0, 1], sizes = [8, 384], strides = [1, 1]} : vector<8x386xf32> to vector<8x384xf32>
    %85 = vector.extract_strided_slice %0 {offsets = [0, 4], sizes = [8, 1], strides = [1, 1]} : vector<8x9xf32> to vector<8x1xf32>
    %86 = vector.broadcast %85 : vector<8x1xf32> to vector<8x384xf32>
    %87 = arith.mulf %84, %86 : vector<8x384xf32>
    %88 = arith.addf %83, %87 : vector<8x384xf32>
    %89 = vector.extract_strided_slice %78 {offsets = [0, 2], sizes = [8, 384], strides = [1, 1]} : vector<8x386xf32> to vector<8x384xf32>
    %90 = vector.extract_strided_slice %0 {offsets = [0, 5], sizes = [8, 1], strides = [1, 1]} : vector<8x9xf32> to vector<8x1xf32>
    %91 = vector.broadcast %90 : vector<8x1xf32> to vector<8x384xf32>
    %92 = arith.mulf %89, %91 : vector<8x384xf32>
    %93 = arith.addf %88, %92 : vector<8x384xf32>
    %c1_21 = arith.constant 1 : index
    %c0_22 = arith.constant 0 : index
    %c36_23 = arith.constant 36 : index
    %94 = vector.load %arg1[%c1_21, %c0_22, %c36_23] : memref<2x8x422xf32, #tpu.memory_space<vmem>>, vector<1x8x386xf32>
    %95 = vector.shape_cast %94 : vector<1x8x386xf32> to vector<8x386xf32>
    %96 = vector.extract_strided_slice %95 {offsets = [0, 0], sizes = [8, 384], strides = [1, 1]} : vector<8x386xf32> to vector<8x384xf32>
    %97 = vector.extract_strided_slice %0 {offsets = [0, 6], sizes = [8, 1], strides = [1, 1]} : vector<8x9xf32> to vector<8x1xf32>
    %98 = vector.broadcast %97 : vector<8x1xf32> to vector<8x384xf32>
    %99 = arith.mulf %96, %98 : vector<8x384xf32>
    %100 = arith.addf %93, %99 : vector<8x384xf32>
    %101 = vector.extract_strided_slice %95 {offsets = [0, 1], sizes = [8, 384], strides = [1, 1]} : vector<8x386xf32> to vector<8x384xf32>
    %102 = vector.extract_strided_slice %0 {offsets = [0, 7], sizes = [8, 1], strides = [1, 1]} : vector<8x9xf32> to vector<8x1xf32>
    %103 = vector.broadcast %102 : vector<8x1xf32> to vector<8x384xf32>
    %104 = arith.mulf %101, %103 : vector<8x384xf32>
    %105 = arith.addf %100, %104 : vector<8x384xf32>
    %106 = vector.extract_strided_slice %95 {offsets = [0, 2], sizes = [8, 384], strides = [1, 1]} : vector<8x386xf32> to vector<8x384xf32>
    %107 = vector.extract_strided_slice %0 {offsets = [0, 8], sizes = [8, 1], strides = [1, 1]} : vector<8x9xf32> to vector<8x1xf32>
    %108 = vector.broadcast %107 : vector<8x1xf32> to vector<8x384xf32>
    %109 = arith.mulf %106, %108 : vector<8x384xf32>
    %110 = arith.addf %105, %109 : vector<8x384xf32>
    %cst_24 = arith.constant dense<0.000000e+00> : vector<16x384xf32>
    %111 = tpu.matmul %1, %110, %cst_24 {dimension_numbers = #tpu.dot_dimension_numbers<[1], [0], [0], [1], [0, 0, 1, 1], [], []>} : vector<16x8xf32>, vector<8x384xf32>, vector<16x384xf32> -> vector<16x384xf32>
    %112 = vector.broadcast %2 : vector<16x1xf32> to vector<16x384xf32>
    %113 = arith.addf %111, %112 : vector<16x384xf32>
    %cst_25 = arith.constant 0.000000e+00 : f32
    %114 = vector.broadcast %cst_25 : f32 to vector<16x384xf32>
    %115 = arith.maximumf %113, %114 : vector<16x384xf32>
    %c1_26 = arith.constant 1 : index
    %c0_27 = arith.constant 0 : index
    %c0_28 = arith.constant 0 : index
    %116 = vector.load %arg5[%c1_26, %c0_27, %c0_28] : memref<2x16x384xf32, #tpu.memory_space<vmem>>, vector<1x16x384xf32>
    %117 = vector.shape_cast %116 : vector<1x16x384xf32> to vector<16x384xf32>
    %118 = vector.shape_cast %115 : vector<16x384xf32> to vector<1x16x384xf32>
    tpu.vector_store %arg5[%c1_26, %c0_27, %c0_28], %118 {strides = array<i32>} : memref<2x16x384xf32, #tpu.memory_space<vmem>>, vector<1x16x384xf32>,
    return
  }
  func.func @transform_0(%arg0: i32) -> (i32, i32, i32) {
    %c0_i32 = arith.constant 0 : i32
    %c0_i32_0 = arith.constant 0 : i32
    %c0_i32_1 = arith.constant 0 : i32
    return %arg0, %c0_i32, %c0_i32_0 : i32, i32, i32
  }
  func.func @transform_1(%arg0: i32) -> (i32, i32) {
    %c0_i32 = arith.constant 0 : i32
    %c0_i32_0 = arith.constant 0 : i32
    %c0_i32_1 = arith.constant 0 : i32
    return %c0_i32, %c0_i32_0 : i32, i32
  }
  func.func @transform_2(%arg0: i32) -> (i32, i32) {
    %c0_i32 = arith.constant 0 : i32
    %c0_i32_0 = arith.constant 0 : i32
    %c0_i32_1 = arith.constant 0 : i32
    return %c0_i32, %c0_i32_0 : i32, i32
  }
  func.func @transform_3(%arg0: i32) -> (i32, i32) {
    %c0_i32 = arith.constant 0 : i32
    %c0_i32_0 = arith.constant 0 : i32
    %c0_i32_1 = arith.constant 0 : i32
    return %c0_i32, %c0_i32_0 : i32, i32
  }
  func.func @transform_4(%arg0: i32) -> (i32, i32, i32) {
    %c0_i32 = arith.constant 0 : i32
    %c0_i32_0 = arith.constant 0 : i32
    %c0_i32_1 = arith.constant 0 : i32
    return %arg0, %c0_i32, %c0_i32_0 : i32, i32, i32
  }
}

</mosaic_0001>

<llo_original>
// kernel: tpu_custom_call.1
$region0: #{tpu_custom_call.1}
  #allocation0 [shape = 'u32[]', space=smem, size = 0x4, offset = 0x4, fixed_abs, tag = 'smem constant byte address 0x4 - core index']
  #allocation1 [shape = 'u32[144,128]{1,0:T(1,128)}', space=vmem, size = 0x12000, scoped, tag = 'internal scratch']
  %s0 = inlined_call_operand.hbm [shape: f32[4,8,422], index: 0, kind: input, shape index: {}]
  %s1 = inlined_call_operand.vmem [shape: f32[8,9], index: 1, kind: input, shape index: {}]
  %s2 = inlined_call_operand.vmem [shape: f32[16,8], index: 2, kind: input, shape index: {}]
  %s3 = inlined_call_operand.vmem [shape: f32[16,1], index: 3, kind: input, shape index: {}]
  %s4 = inlined_call_operand.hbm [shape: f32[4,16,384], index: 4, kind: output, shape index: {}]
  %s5 = sld [smem:[#allocation0]]
  $region53: #{tpu_custom_call.1} parent=0
    _
  %s7 = ssub.s32 1, %s5
  %s8 = scalar_select 0, %s7, %s5
  $region1: #{tpu_custom_call.1} parent=0
    #allocation2 [shape = 'u8[65536]{0}', space=vmem, size = 0x10000, scoped, tag = 'input window, operand 0']
    #allocation3 [shape = 's32[2]{0}', space=sflag, size = 0x8, scoped, tag = 'scoped memory for tpu_custom_call.1']
    #allocation4 [shape = 's32[2]{0}', space=sflag, size = 0x8, scoped, tag = 'scoped memory for tpu_custom_call.1']
    #allocation5 [shape = 'u8[98304]{0}', space=vmem, size = 0x18000, scoped, tag = 'output window, operand 0']
    %9 = vsyncpa [#allocation3], 0
    %s10 = scalar_lea.sflag [#allocation3], 1
    %11 = vsyncpa %s10, 0
    %12 = vsyncpa [#allocation4], 0
    %s13 = scalar_lea.sflag [#allocation4], 1
    %14 = vsyncpa %s13, 0
    loop: start=0, step=1, limit=4
    $region2: #{tpu_custom_call.1} parent=1 // loop_pre_header
      _
    $region3: #{tpu_custom_call.1} parent=1 // loop_header
      %s16 = sphi 0, %s20
      %p17 = scmp.ge.s32.totalorder %s16, 4
      %s26 = sphi 0, %s28
      %s29 = sphi 0, %s26
      %s30 = sphi 0, %s29
      %s46 = sphi 0, %s30
      %s50 = sphi 0, %s50
      %s52 = sphi 0, %s50
      %s53 = sphi 0, %s52
      %s67 = sphi 0, %s53
      %s71 = sphi 0, %s71
      %s73 = sphi 0, %s71
      %s74 = sphi 0, %s73
      %s88 = sphi 0, %s74
      %s92 = sphi 0, %s92
      %s94 = sphi 0, %s92
      %s95 = sphi 0, %s94
      %s109 = sphi 0, %s95
      %s115 = sphi 0, %s117
      %s118 = sphi 0, %s115
      %s119 = sphi 0, %s118
      %s135 = sphi 0, %s119
    $region4: #{tpu_custom_call.1} parent=1 // loop_header_branch
      %19 = sbr.rel (%p17) target = $region8
    $region5: #{tpu_custom_call.1} parent=1 // loop_body
      %s21 = ssub.s32 %s16, 1
      %s22 = ssub.s32 %s16, 2
      %s23 = sadd.s32 %s16, 1
      %s24 = ssub.s32 %s16, %s23
      %p25 = scmp.eq.s32.totalorder %s24, 0
      %s27 = sadd.s32 %s26, 1
      %s28 = scalar_select %p25, %s26, %s27
      %p31 = pneg %p25
      %p32 = scmp.eq.s32.totalorder %s16, 1
      %p33 = por %p31, %p32
      %p34 = scmp.ne.s32.totalorder %s26, %s29
      %p35 = scmp.eq.s32.totalorder %s16, 0
      %p36 = por %p34, %p35
      %p37 = scmp.ne.s32.totalorder %s26, %s29
      %p38 = scmp.eq.s32.totalorder %s21, 1
      %p39 = por %p37, %p38
      %p40 = scmp.ne.s32.totalorder %s29, %s30
      %p41 = scmp.eq.s32.totalorder %s21, 0
      %p42 = por %p40, %p41
      %p43 = scmp.ne.s32.totalorder %s29, %s30
      %p44 = scmp.eq.s32.totalorder %s22, 1
      %p45 = por %p43, %p44
      %p47 = scmp.ne.s32.totalorder %s30, %s46
      %p48 = scmp.eq.s32.totalorder %s22, 0
      %p49 = por %p47, %p48
      %s51 = sadd.s32 %s50, 1
      %p54 = scmp.eq.s32.totalorder %s16, 1
      %p55 = scmp.ne.s32.totalorder %s50, %s52
      %p56 = scmp.eq.s32.totalorder %s16, 0
      %p57 = por %p55, %p56
      %p58 = scmp.ne.s32.totalorder %s50, %s52
      %p59 = scmp.eq.s32.totalorder %s21, 1
      %p60 = por %p58, %p59
      %p61 = scmp.ne.s32.totalorder %s52, %s53
      %p62 = scmp.eq.s32.totalorder %s21, 0
      %p63 = por %p61, %p62
      %p64 = scmp.ne.s32.totalorder %s52, %s53
      %p65 = scmp.eq.s32.totalorder %s22, 1
      %p66 = por %p64, %p65
      %p68 = scmp.ne.s32.totalorder %s53, %s67
      %p69 = scmp.eq.s32.totalorder %s22, 0
      %p70 = por %p68, %p69
      %s72 = sadd.s32 %s71, 1
      %p75 = scmp.eq.s32.totalorder %s16, 1
      %p76 = scmp.ne.s32.totalorder %s71, %s73
      %p77 = scmp.eq.s32.totalorder %s16, 0
      %p78 = por %p76, %p77
      %p79 = scmp.ne.s32.totalorder %s71, %s73
      %p80 = scmp.eq.s32.totalorder %s21, 1
      %p81 = por %p79, %p80
      %p82 = scmp.ne.s32.totalorder %s73, %s74
      %p83 = scmp.eq.s32.totalorder %s21, 0
      %p84 = por %p82, %p83
      %p85 = scmp.ne.s32.totalorder %s73, %s74
      %p86 = scmp.eq.s32.totalorder %s22, 1
      %p87 = por %p85, %p86
      %p89 = scmp.ne.s32.totalorder %s74, %s88
      %p90 = scmp.eq.s32.totalorder %s22, 0
      %p91 = por %p89, %p90
      %s93 = sadd.s32 %s92, 1
      %p96 = scmp.eq.s32.totalorder %s16, 1
      %p97 = scmp.ne.s32.totalorder %s92, %s94
      %p98 = scmp.eq.s32.totalorder %s16, 0
      %p99 = por %p97, %p98
      %p100 = scmp.ne.s32.totalorder %s92, %s94
      %p101 = scmp.eq.s32.totalorder %s21, 1
      %p102 = por %p100, %p101
      %p103 = scmp.ne.s32.totalorder %s94, %s95
      %p104 = scmp.eq.s32.totalorder %s21, 0
      %p105 = por %p103, %p104
      %p106 = scmp.ne.s32.totalorder %s94, %s95
      %p107 = scmp.eq.s32.totalorder %s22, 1
      %p108 = por %p106, %p107
      %p110 = scmp.ne.s32.totalorder %s95, %s109
      %p111 = scmp.eq.s32.totalorder %s22, 0
      %p112 = por %p110, %p111
      %s113 = ssub.s32 %s16, %s23
      %p114 = scmp.eq.s32.totalorder %s113, 0
      %s116 = sadd.s32 %s115, 1
      %s117 = scalar_select %p114, %s115, %s116
      %p120 = pneg %p114
      %p121 = scmp.eq.s32.totalorder %s16, 1
      %p122 = por %p120, %p121
      %p123 = scmp.ne.s32.totalorder %s115, %s118
      %p124 = scmp.eq.s32.totalorder %s16, 0
      %p125 = por %p123, %p124
      %p126 = scmp.ne.s32.totalorder %s115, %s118
      %p127 = scmp.eq.s32.totalorder %s21, 1
      %p128 = por %p126, %p127
      %p129 = scmp.ne.s32.totalorder %s118, %s119
      %p130 = scmp.eq.s32.totalorder %s21, 0
      %p131 = por %p129, %p130
      %p132 = scmp.ne.s32.totalorder %s118, %s119
      %p133 = scmp.eq.s32.totalorder %s22, 1
      %p134 = por %p132, %p133
      %p136 = scmp.ne.s32.totalorder %s119, %s135
      %p137 = scmp.eq.s32.totalorder %s22, 0
      %p138 = por %p136, %p137
      %p139 = scmp.le.s32.totalorder 1, %s16
      %p140 = scmp.lt.s32.totalorder %s16, 3
      %p141 = pnand %p139, %p140
      %p142 = pneg %p141
      // Predicated region
      $region9: #{tpu_custom_call.1} parent=5 // pred_check
        _
      $region10: #{tpu_custom_call.1} parent=5 // pred_check_branch
        %144 = sbr.rel (%p141) target = $region12
      $region11: #{tpu_custom_call.1} parent=5 // pred_region
        %s145 = ssub.s32 %s16, 1
        // Predicated region
        $region13: #{tpu_custom_call.1} parent=11 // pred_check
          %p146 = pneg %p63
        $region14: #{tpu_custom_call.1} parent=11 // pred_check_branch
          %148 = sbr.rel (%p146) target = $region16
        $region15: #{tpu_custom_call.1} parent=11 // pred_region
          _
        $region16: #{tpu_custom_call.1} parent=11 // pred_fallthru
          _
        // Predicated region
        $region17: #{tpu_custom_call.1} parent=11 // pred_check
          %p149 = pneg %p84
        $region18: #{tpu_custom_call.1} parent=11 // pred_check_branch
          %151 = sbr.rel (%p149) target = $region20
        $region19: #{tpu_custom_call.1} parent=11 // pred_region
          _
        $region20: #{tpu_custom_call.1} parent=11 // pred_fallthru
          _
        // Predicated region
        $region21: #{tpu_custom_call.1} parent=11 // pred_check
          %p152 = pneg %p105
        $region22: #{tpu_custom_call.1} parent=11 // pred_check_branch
          %154 = sbr.rel (%p152) target = $region24
        $region23: #{tpu_custom_call.1} parent=11 // pred_region
          _
        $region24: #{tpu_custom_call.1} parent=11 // pred_fallthru
          _
      $region12: #{tpu_custom_call.1} parent=5 // pred_fallthru
        _
      %p155 = scmp.lt.s32.totalorder %s16, 2
      // Predicated region
      $region25: #{tpu_custom_call.1} parent=5 // pred_check
        %p156 = pneg %p155
      $region26: #{tpu_custom_call.1} parent=5 // pred_check_branch
        %158 = sbr.rel (%p156) target = $region28
      $region27: #{tpu_custom_call.1} parent=5 // pred_region
        // Predicated region
        $region29: #{tpu_custom_call.1} parent=27 // pred_check
          %p159 = pneg %p36
        $region30: #{tpu_custom_call.1} parent=27 // pred_check_branch
          %161 = sbr.rel (%p159) target = $region32
        $region31: #{tpu_custom_call.1} parent=27 // pred_region
          %s162 = sand.u32 %s26, 1
          %s163 = scalar_lea.sflag [#allocation3], %s162
          %s164 = sand.u32 %s26, 1
          %s165 = smul.addr %s164, 64
          %s166 = scalar_lea.vmem [#allocation2], %s165
          %s167 = smul.u32 2, %s16
          %s169 = ssub.s32 1024, 1024
          %170 = vsyncadd %s163, %s169
          %s171 = smul.addr %s167, 4
          %s172 = smul.addr %s171, 128
          %s173 = scalar_lea.hbm %s0, %s172
          %s174 = sshll.u32 %s166, 4
          %s175 = int_to_ptr.vmem [resolvable:$true] %s174
          %180 = dma.hbm_to_vmem [thread:$0]  %s173, 1024, %s175, %s163, 512, 512, 32
        $region32: #{tpu_custom_call.1} parent=27 // pred_fallthru
          _
      $region28: #{tpu_custom_call.1} parent=5 // pred_fallthru
        _
      %p181 = scmp.le.s32.totalorder 1, %s16
      %p182 = scmp.lt.s32.totalorder %s16, 3
      %p183 = pnand %p181, %p182
      %p184 = pneg %p183
      // Predicated region
      $region33: #{tpu_custom_call.1} parent=5 // pred_check
        _
      $region34: #{tpu_custom_call.1} parent=5 // pred_check_branch
        %186 = sbr.rel (%p183) target = $region36
      $region35: #{tpu_custom_call.1} parent=5 // pred_region
        %s187 = ssub.s32 %s16, 1
        %s188 = sand.u32 %s29, 1
        %s189 = scalar_lea.sflag [#allocation3], %s188
        %s190 = sand.u32 %s29, 1
        %s191 = smul.addr %s190, 64
        %s192 = scalar_lea.vmem [#allocation2], %s191
        // Predicated region
        $region37: #{tpu_custom_call.1} parent=35 // pred_check
          %p193 = pneg %p42
        $region38: #{tpu_custom_call.1} parent=35 // pred_check_branch
          %195 = sbr.rel (%p193) target = $region40
        $region39: #{tpu_custom_call.1} parent=35 // pred_region
          %196 = dma.done %s189, 1024
        $region40: #{tpu_custom_call.1} parent=35 // pred_fallthru
          _
        %s197 = sand.u32 %s29, 1
        %s198 = scalar_lea.sflag [#allocation3], %s197
        %s199 = sand.u32 %s29, 1
        %s200 = smul.addr %s199, 64
        %s201 = scalar_lea.vmem [#allocation2], %s200
        %p202 = pneg %p42
        %p203 = pneg %p39
        %p204 = pneg %p63
        %p205 = pneg %p60
        %p206 = pneg %p84
        %p207 = pneg %p81
        %p208 = pneg %p105
        %p209 = pneg %p102
        %p210 = pneg %p131
        %p211 = pneg %p128
        %s212 = sand.u32 %s118, 1
        %s213 = scalar_lea.sflag [#allocation4], %s212
        %s214 = sand.u32 %s118, 1
        %s215 = smul.addr %s214, 96
        %s216 = scalar_lea.vmem [#allocation5], %s215
        %s217 = smul.u32 2, %s21
        %s218 = smul.u32 2, %s21
        %v219 = vld [vmem:[%s1] sm:$0xff]
        %v220 = vld [vmem:[%s2] sm:$0xff]
        %v221 = vld [vmem:[%s2 + $0x8] sm:$0xff]
        %v222 = vld [vmem:[%s3] sm:$0xff]
        %v223 = vld [vmem:[%s3 + $0x8] sm:$0xff]
        %v224 = vld [vmem:[%s192] sm:$0xff]
        %v225 = vld [vmem:[%s192 + $0x8] sm:$0xff]
        %v226 = vld [vmem:[%s192 + $0x10] sm:$0xff]
        %v227 = vld [vmem:[%s192 + $0x18] sm:$0xff]
        %229 = vset.pattern.permute.xlu0 0
        %230 = vperm.xlu0 %229, %v219
        %v231 = vpop.permute.xlu0 %230
        %v233 = vmul.f32 %v224, %v231
        %v234 = vmul.f32 %v225, %v231
        %v235 = vmul.f32 %v226, %v231
        %236 = vset.pattern.permute.xlu0 1
        %237 = vperm.xlu0 %236, %v219
        %v238 = vpop.permute.xlu0 %237
        %v240 = vmul.f32 %v224, %v238
        %v241 = vmul.f32 %v225, %v238
        %v242 = vmul.f32 %v226, %v238
        %v243 = vmul.f32 %v227, %v238
        %248 = vrot.lane.b32.xlu0 %v240, 127
        %v249 = vpop.permute.xlu0 %248
        %250 = vrot.lane.b32.xlu0 %v241, 127
        %v251 = vpop.permute.xlu0 %250
        %252 = vrot.lane.b32.xlu0 %v242, 127
        %v253 = vpop.permute.xlu0 %252
        %254 = vrot.lane.b32.xlu0 %v243, 127
        %v255 = vpop.permute.xlu0 %254
        %vm256 = vcmask 1039360
        %v257 = vsel %vm256, %v249, %v251
        %v258 = vsel %vm256, %v251, %v253
        %v259 = vsel %vm256, %v253, %v255
        %v263 = vadd.f32 %v233, %v257
        %v264 = vadd.f32 %v234, %v258
        %v265 = vadd.f32 %v235, %v259
        %266 = vset.pattern.permute.xlu0 2
        %267 = vperm.xlu0 %266, %v219
        %v268 = vpop.permute.xlu0 %267
        %v270 = vmul.f32 %v224, %v268
        %v271 = vmul.f32 %v225, %v268
        %v272 = vmul.f32 %v226, %v268
        %v273 = vmul.f32 %v227, %v268
        %278 = vrot.lane.b32.xlu0 %v270, 126
        %v279 = vpop.permute.xlu0 %278
        %280 = vrot.lane.b32.xlu0 %v271, 126
        %v281 = vpop.permute.xlu0 %280
        %282 = vrot.lane.b32.xlu0 %v272, 126
        %v283 = vpop.permute.xlu0 %282
        %284 = vrot.lane.b32.xlu0 %v273, 126
        %v285 = vpop.permute.xlu0 %284
        %vm286 = vcmask 1031168
        %v287 = vsel %vm286, %v279, %v281
        %v288 = vsel %vm286, %v281, %v283
        %v289 = vsel %vm286, %v283, %v285
        %v293 = vadd.f32 %v263, %v287
        %v294 = vadd.f32 %v264, %v288
        %v295 = vadd.f32 %v265, %v289
        %296 = vset.pattern.permute.xlu0 3
        %297 = vperm.xlu0 %296, %v219
        %v298 = vpop.permute.xlu0 %297
        %v300 = vmul.f32 %v224, %v298
        %v301 = vmul.f32 %v225, %v298
        %v302 = vmul.f32 %v226, %v298
        %v303 = vmul.f32 %v227, %v298
        %308 = vrot.lane.b32.xlu0 %v300, 110
        %v309 = vpop.permute.xlu0 %308
        %310 = vrot.lane.b32.xlu0 %v301, 110
        %v311 = vpop.permute.xlu0 %310
        %312 = vrot.lane.b32.xlu0 %v302, 110
        %v313 = vpop.permute.xlu0 %312
        %314 = vrot.lane.b32.xlu0 %v303, 110
        %v315 = vpop.permute.xlu0 %314
        %vm316 = vcmask 900096
        %v317 = vsel %vm316, %v309, %v311
        %v318 = vsel %vm316, %v311, %v313
        %v319 = vsel %vm316, %v313, %v315
        %v323 = vadd.f32 %v293, %v317
        %v324 = vadd.f32 %v294, %v318
        %v325 = vadd.f32 %v295, %v319
        %326 = vset.pattern.permute.xlu0 4
        %327 = vperm.xlu0 %326, %v219
        %v328 = vpop.permute.xlu0 %327
        %v330 = vmul.f32 %v224, %v328
        %v331 = vmul.f32 %v225, %v328
        %v332 = vmul.f32 %v226, %v328
        %v333 = vmul.f32 %v227, %v328
        %338 = vrot.lane.b32.xlu0 %v330, 109
        %v339 = vpop.permute.xlu0 %338
        %340 = vrot.lane.b32.xlu0 %v331, 109
        %v341 = vpop.permute.xlu0 %340
        %342 = vrot.lane.b32.xlu0 %v332, 109
        %v343 = vpop.permute.xlu0 %342
        %344 = vrot.lane.b32.xlu0 %v333, 109
        %v345 = vpop.permute.xlu0 %344
        %vm346 = vcmask 891904
        %v347 = vsel %vm346, %v339, %v341
        %v348 = vsel %vm346, %v341, %v343
        %v349 = vsel %vm346, %v343, %v345
        %v353 = vadd.f32 %v323, %v347
        %v354 = vadd.f32 %v324, %v348
        %v355 = vadd.f32 %v325, %v349
        %356 = vset.pattern.permute.xlu0 5
        %357 = vperm.xlu0 %356, %v219
        %v358 = vpop.permute.xlu0 %357
        %v360 = vmul.f32 %v224, %v358
        %v361 = vmul.f32 %v225, %v358
        %v362 = vmul.f32 %v226, %v358
        %v363 = vmul.f32 %v227, %v358
        %368 = vrot.lane.b32.xlu0 %v360, 108
        %v369 = vpop.permute.xlu0 %368
        %370 = vrot.lane.b32.xlu0 %v361, 108
        %v371 = vpop.permute.xlu0 %370
        %372 = vrot.lane.b32.xlu0 %v362, 108
        %v373 = vpop.permute.xlu0 %372
        %374 = vrot.lane.b32.xlu0 %v363, 108
        %v375 = vpop.permute.xlu0 %374
        %vm376 = vcmask 883712
        %v377 = vsel %vm376, %v369, %v371
        %v378 = vsel %vm376, %v371, %v373
        %v379 = vsel %vm376, %v373, %v375
        %v383 = vadd.f32 %v353, %v377
        %v384 = vadd.f32 %v354, %v378
        %v385 = vadd.f32 %v355, %v379
        %386 = vset.pattern.permute.xlu0 6
        %387 = vperm.xlu0 %386, %v219
        %v388 = vpop.permute.xlu0 %387
        %v390 = vmul.f32 %v224, %v388
        %v391 = vmul.f32 %v225, %v388
        %v392 = vmul.f32 %v226, %v388
        %v393 = vmul.f32 %v227, %v388
        %398 = vrot.lane.b32.xlu0 %v390, 92
        %v399 = vpop.permute.xlu0 %398
        %400 = vrot.lane.b32.xlu0 %v391, 92
        %v401 = vpop.permute.xlu0 %400
        %402 = vrot.lane.b32.xlu0 %v392, 92
        %v403 = vpop.permute.xlu0 %402
        %404 = vrot.lane.b32.xlu0 %v393, 92
        %v405 = vpop.permute.xlu0 %404
        %vm406 = vcmask 752640
        %v407 = vsel %vm406, %v399, %v401
        %v408 = vsel %vm406, %v401, %v403
        %v409 = vsel %vm406, %v403, %v405
        %v413 = vadd.f32 %v383, %v407
        %v414 = vadd.f32 %v384, %v408
        %v415 = vadd.f32 %v385, %v409
        %416 = vset.pattern.permute.xlu0 7
        %417 = vperm.xlu0 %416, %v219
        %v418 = vpop.permute.xlu0 %417
        %v420 = vmul.f32 %v224, %v418
        %v421 = vmul.f32 %v225, %v418
        %v422 = vmul.f32 %v226, %v418
        %v423 = vmul.f32 %v227, %v418
        %428 = vrot.lane.b32.xlu0 %v420, 91
        %v429 = vpop.permute.xlu0 %428
        %430 = vrot.lane.b32.xlu0 %v421, 91
        %v431 = vpop.permute.xlu0 %430
        %432 = vrot.lane.b32.xlu0 %v422, 91
        %v433 = vpop.permute.xlu0 %432
        %434 = vrot.lane.b32.xlu0 %v423, 91
        %v435 = vpop.permute.xlu0 %434
        %vm436 = vcmask 744448
        %v437 = vsel %vm436, %v429, %v431
        %v438 = vsel %vm436, %v431, %v433
        %v439 = vsel %vm436, %v433, %v435
        %v443 = vadd.f32 %v413, %v437
        %v444 = vadd.f32 %v414, %v438
        %v445 = vadd.f32 %v415, %v439
        %446 = vset.pattern.permute.xlu0 8
        %447 = vperm.xlu0 %446, %v219
        %v448 = vpop.permute.xlu0 %447
        %v450 = vmul.f32 %v224, %v448
        %v451 = vmul.f32 %v225, %v448
        %v452 = vmul.f32 %v226, %v448
        %v453 = vmul.f32 %v227, %v448
        %458 = vrot.lane.b32.xlu0 %v450, 90
        %v459 = vpop.permute.xlu0 %458
        %460 = vrot.lane.b32.xlu0 %v451, 90
        %v461 = vpop.permute.xlu0 %460
        %462 = vrot.lane.b32.xlu0 %v452, 90
        %v463 = vpop.permute.xlu0 %462
        %464 = vrot.lane.b32.xlu0 %v453, 90
        %v465 = vpop.permute.xlu0 %464
        %vm466 = vcmask 736256
        %v467 = vsel %vm466, %v459, %v461
        %v468 = vsel %vm466, %v461, %v463
        %v469 = vsel %vm466, %v463, %v465
        %v473 = vadd.f32 %v443, %v467
        %v474 = vadd.f32 %v444, %v468
        %v475 = vadd.f32 %v445, %v469
        %477 = vset.pattern.permute.xlu0 0
        %478 = vperm.xlu0 %477, %v222
        %v479 = vpop.permute.xlu0 %478
        %482 = vset.pattern.permute.xlu0 0
        %483 = vperm.xlu0 %482, %v223
        %v484 = vpop.permute.xlu0 %483
        %vm486 = vcmask 64512
        %v488 = vsel %vm486, %v220, 0
        %v491 = vsel %vm486, %v221, 0
        %493 = vmatprep.subr.mxu0 0.0
        %494 = vmatpush1.msra.mxu0 0.0
        %495 = vmatprep.subr.mxu0 0.0
        %496 = vmatpush1.msra.mxu0 0.0
        %497 = vmatprep.subr.mxu0 0.0
        %498 = vmatpush1.msra.mxu0 0.0
        %499 = vmatprep.subr.mxu0 0.0
        %500 = vmatpush1.msra.mxu0 0.0
        %501 = vmatprep.subr.mxu0 0.0
        %502 = vmatpush1.msra.mxu0 0.0
        %503 = vmatprep.subr.mxu0 0.0
        %504 = vmatpush1.msra.mxu0 0.0
        %505 = vmatprep.subr.mxu0 0.0
        %506 = vmatpush1.msra.mxu0 0.0
        %507 = vmatprep.subr.mxu0 0.0
        %508 = vmatpush1.msra.mxu0 0.0
        %509 = vmatprep.subr.mxu0 0.0
        %510 = vmatpush1.msra.mxu0 0.0
        %511 = vmatprep.subr.mxu0 0.0
        %512 = vmatpush1.msra.mxu0 0.0
        %513 = vmatprep.subr.mxu0 0.0
        %514 = vmatpush1.msra.mxu0 0.0
        %515 = vmatprep.subr.mxu0 0.0
        %516 = vmatpush1.msra.mxu0 0.0
        %517 = vmatprep.subr.mxu0 0.0
        %518 = vmatpush1.msra.mxu0 0.0
        %519 = vmatprep.subr.mxu0 0.0
        %520 = vmatpush1.msra.mxu0 0.0
        %521 = vmatprep.subr.mxu0 0.0
        %522 = vmatpush1.msra.mxu0 0.0
        %523 = vmatprep.subr.mxu0 %v474
        %524 = vmatpush1.msra.mxu0 %v473
        %525 = vmatprep.subr.mxu0 0.0
        %526 = vmatpush2.msra.mxu0 0.0
        %527 = vmatprep.subr.mxu0 0.0
        %528 = vmatpush2.msra.mxu0 0.0
        %529 = vmatprep.subr.mxu0 0.0
        %530 = vmatpush2.msra.mxu0 0.0
        %531 = vmatprep.subr.mxu0 0.0
        %532 = vmatpush2.msra.mxu0 0.0
        %533 = vmatprep.subr.mxu0 0.0
        %534 = vmatpush2.msra.mxu0 0.0
        %535 = vmatprep.subr.mxu0 0.0
        %536 = vmatpush2.msra.mxu0 0.0
        %537 = vmatprep.subr.mxu0 0.0
        %538 = vmatpush2.msra.mxu0 0.0
        %539 = vmatprep.subr.mxu0 0.0
        %540 = vmatpush2.msra.mxu0 0.0
        %541 = vmatprep.subr.mxu0 0.0
        %542 = vmatpush2.msra.mxu0 0.0
        %543 = vmatprep.subr.mxu0 0.0
        %544 = vmatpush2.msra.mxu0 0.0
        %545 = vmatprep.subr.mxu0 0.0
        %546 = vmatpush2.msra.mxu0 0.0
        %547 = vmatprep.subr.mxu0 0.0
        %548 = vmatpush2.msra.mxu0 0.0
        %549 = vmatprep.subr.mxu0 0.0
        %550 = vmatpush2.msra.mxu0 0.0
        %551 = vmatprep.subr.mxu0 0.0
        %552 = vmatpush2.msra.mxu0 0.0
        %553 = vmatprep.subr.mxu0 0.0
        %554 = vmatpush2.msra.mxu0 0.0
        %555 = vmatprep.subr.mxu0 0.0
        %556 = vmatpush2.msra.mxu0 0.0
        %557 = vmatprep.mubr.f32.mxu0 0.0
        %558 = vmatmul.mubr.f32.gmra.mxu0 %v488
        %v559 = vpop.f32.mrf.mxu0
        %v560 = vadd.f32 %v479, %v559
        %v561 = vpop.f32.mrf.mxu0
        %v562 = vadd.f32 %v479, %v561
        %563 = vmatprep.mubr.f32.mxu0 0.0
        %564 = vmatmul.mubr.f32.gmra.mxu0 %v491
        %v565 = vpop.f32.mrf.mxu0
        %v566 = vadd.f32 %v484, %v565
        %v567 = vpop.f32.mrf.mxu0
        %v568 = vadd.f32 %v484, %v567
        %569 = vdwg.mxu0
        %570 = vmatprep.subr.mxu0 0.0
        %571 = vmatpush1.msra.mxu0 0.0
        %572 = vmatprep.subr.mxu0 0.0
        %573 = vmatpush1.msra.mxu0 0.0
        %574 = vmatprep.subr.mxu0 0.0
        %575 = vmatpush1.msra.mxu0 0.0
        %576 = vmatprep.subr.mxu0 0.0
        %577 = vmatpush1.msra.mxu0 0.0
        %578 = vmatprep.subr.mxu0 0.0
        %579 = vmatpush1.msra.mxu0 0.0
        %580 = vmatprep.subr.mxu0 0.0
        %581 = vmatpush1.msra.mxu0 0.0
        %582 = vmatprep.subr.mxu0 0.0
        %583 = vmatpush1.msra.mxu0 0.0
        %584 = vmatprep.subr.mxu0 0.0
        %585 = vmatpush1.msra.mxu0 0.0
        %586 = vmatprep.subr.mxu0 0.0
        %587 = vmatpush1.msra.mxu0 0.0
        %588 = vmatprep.subr.mxu0 0.0
        %589 = vmatpush1.msra.mxu0 0.0
        %590 = vmatprep.subr.mxu0 0.0
        %591 = vmatpush1.msra.mxu0 0.0
        %592 = vmatprep.subr.mxu0 0.0
        %593 = vmatpush1.msra.mxu0 0.0
        %594 = vmatprep.subr.mxu0 0.0
        %595 = vmatpush1.msra.mxu0 0.0
        %596 = vmatprep.subr.mxu0 0.0
        %597 = vmatpush1.msra.mxu0 0.0
        %598 = vmatprep.subr.mxu0 0.0
        %599 = vmatpush1.msra.mxu0 0.0
        %600 = vmatprep.subr.mxu0 0.0
        %601 = vmatpush1.msra.mxu0 %v475
        %602 = vmatprep.subr.mxu0 0.0
        %603 = vmatpush2.msra.mxu0 0.0
        %604 = vmatprep.subr.mxu0 0.0
        %605 = vmatpush2.msra.mxu0 0.0
        %606 = vmatprep.subr.mxu0 0.0
        %607 = vmatpush2.msra.mxu0 0.0
        %608 = vmatprep.subr.mxu0 0.0
        %609 = vmatpush2.msra.mxu0 0.0
        %610 = vmatprep.subr.mxu0 0.0
        %611 = vmatpush2.msra.mxu0 0.0
        %612 = vmatprep.subr.mxu0 0.0
        %613 = vmatpush2.msra.mxu0 0.0
        %614 = vmatprep.subr.mxu0 0.0
        %615 = vmatpush2.msra.mxu0 0.0
        %616 = vmatprep.subr.mxu0 0.0
        %617 = vmatpush2.msra.mxu0 0.0
        %618 = vmatprep.subr.mxu0 0.0
        %619 = vmatpush2.msra.mxu0 0.0
        %620 = vmatprep.subr.mxu0 0.0
        %621 = vmatpush2.msra.mxu0 0.0
        %622 = vmatprep.subr.mxu0 0.0
        %623 = vmatpush2.msra.mxu0 0.0
        %624 = vmatprep.subr.mxu0 0.0
        %625 = vmatpush2.msra.mxu0 0.0
        %626 = vmatprep.subr.mxu0 0.0
        %627 = vmatpush2.msra.mxu0 0.0
        %628 = vmatprep.subr.mxu0 0.0
        %629 = vmatpush2.msra.mxu0 0.0
        %630 = vmatprep.subr.mxu0 0.0
        %631 = vmatpush2.msra.mxu0 0.0
        %632 = vmatprep.subr.mxu0 0.0
        %633 = vmatpush2.msra.mxu0 0.0
        %634 = vmatprep.mubr.f32.mxu0 0.0
        %635 = vmatmul.mubr.f32.gmra.mxu0 %v488
        %v636 = vpop.f32.mrf.mxu0
        %v637 = vadd.f32 %v479, %v636
        %v638 = vpop.f32.mrf.mxu0
        %639 = vmatprep.mubr.f32.mxu0 0.0
        %640 = vmatmul.mubr.f32.gmra.mxu0 %v491
        %v641 = vpop.f32.mrf.mxu0
        %v642 = vadd.f32 %v484, %v641
        %v643 = vpop.f32.mrf.mxu0
        %644 = vdwg.mxu0
        %v645 = vmax.f32 %v560, 0.0
        %v646 = vmax.f32 %v562, 0.0
        %v647 = vmax.f32 %v637, 0.0
        %v648 = vmax.f32 %v566, 0.0
        %v649 = vmax.f32 %v568, 0.0
        %v650 = vmax.f32 %v642, 0.0
        %651 = vst [vmem:[%s216] sm:$0xff] %v645
        %652 = vst [vmem:[%s216 + $0x8] sm:$0xff] %v646
        %653 = vst [vmem:[%s216 + $0x10] sm:$0xff] %v647
        %654 = vst [vmem:[%s216 + $0x18] sm:$0xff] %v648
        %655 = vst [vmem:[%s216 + $0x20] sm:$0xff] %v649
        %656 = vst [vmem:[%s216 + $0x28] sm:$0xff] %v650
        %s657 = scalar_lea.vmem %s192, 32 [#allocation2]
        %v658 = vld [vmem:[%s657] sm:$0xff]
        %v659 = vld [vmem:[%s657 + $0x8] sm:$0xff]
        %v660 = vld [vmem:[%s657 + $0x10] sm:$0xff]
        %v661 = vld [vmem:[%s657 + $0x18] sm:$0xff]
        %v662 = vmul.f32 %v658, %v231
        %v663 = vmul.f32 %v659, %v231
        %v664 = vmul.f32 %v660, %v231
        %v665 = vmul.f32 %v658, %v238
        %v666 = vmul.f32 %v659, %v238
        %v667 = vmul.f32 %v660, %v238
        %v668 = vmul.f32 %v661, %v238
        %673 = vrot.lane.b32.xlu0 %v665, 127
        %v674 = vpop.permute.xlu0 %673
        %675 = vrot.lane.b32.xlu0 %v666, 127
        %v676 = vpop.permute.xlu0 %675
        %677 = vrot.lane.b32.xlu0 %v667, 127
        %v678 = vpop.permute.xlu0 %677
        %679 = vrot.lane.b32.xlu0 %v668, 127
        %v680 = vpop.permute.xlu0 %679
        %v681 = vsel %vm256, %v674, %v676
        %v682 = vsel %vm256, %v676, %v678
        %v683 = vsel %vm256, %v678, %v680
        %v687 = vadd.f32 %v662, %v681
        %v688 = vadd.f32 %v663, %v682
        %v689 = vadd.f32 %v664, %v683
        %v690 = vmul.f32 %v658, %v268
        %v691 = vmul.f32 %v659, %v268
        %v692 = vmul.f32 %v660, %v268
        %v693 = vmul.f32 %v661, %v268
        %698 = vrot.lane.b32.xlu0 %v690, 126
        %v699 = vpop.permute.xlu0 %698
        %700 = vrot.lane.b32.xlu0 %v691, 126
        %v701 = vpop.permute.xlu0 %700
        %702 = vrot.lane.b32.xlu0 %v692, 126
        %v703 = vpop.permute.xlu0 %702
        %704 = vrot.lane.b32.xlu0 %v693, 126
        %v705 = vpop.permute.xlu0 %704
        %v706 = vsel %vm286, %v699, %v701
        %v707 = vsel %vm286, %v701, %v703
        %v708 = vsel %vm286, %v703, %v705
        %v712 = vadd.f32 %v687, %v706
        %v713 = vadd.f32 %v688, %v707
        %v714 = vadd.f32 %v689, %v708
        %v715 = vmul.f32 %v658, %v298
        %v716 = vmul.f32 %v659, %v298
        %v717 = vmul.f32 %v660, %v298
        %v718 = vmul.f32 %v661, %v298
        %723 = vrot.lane.b32.xlu0 %v715, 110
        %v724 = vpop.permute.xlu0 %723
        %725 = vrot.lane.b32.xlu0 %v716, 110
        %v726 = vpop.permute.xlu0 %725
        %727 = vrot.lane.b32.xlu0 %v717, 110
        %v728 = vpop.permute.xlu0 %727
        %729 = vrot.lane.b32.xlu0 %v718, 110
        %v730 = vpop.permute.xlu0 %729
        %v731 = vsel %vm316, %v724, %v726
        %v732 = vsel %vm316, %v726, %v728
        %v733 = vsel %vm316, %v728, %v730
        %v737 = vadd.f32 %v712, %v731
        %v738 = vadd.f32 %v713, %v732
        %v739 = vadd.f32 %v714, %v733
        %v740 = vmul.f32 %v658, %v328
        %v741 = vmul.f32 %v659, %v328
        %v742 = vmul.f32 %v660, %v328
        %v743 = vmul.f32 %v661, %v328
        %748 = vrot.lane.b32.xlu0 %v740, 109
        %v749 = vpop.permute.xlu0 %748
        %750 = vrot.lane.b32.xlu0 %v741, 109
        %v751 = vpop.permute.xlu0 %750
        %752 = vrot.lane.b32.xlu0 %v742, 109
        %v753 = vpop.permute.xlu0 %752
        %754 = vrot.lane.b32.xlu0 %v743, 109
        %v755 = vpop.permute.xlu0 %754
        %v756 = vsel %vm346, %v749, %v751
        %v757 = vsel %vm346, %v751, %v753
        %v758 = vsel %vm346, %v753, %v755
        %v762 = vadd.f32 %v737, %v756
        %v763 = vadd.f32 %v738, %v757
        %v764 = vadd.f32 %v739, %v758
        %v765 = vmul.f32 %v658, %v358
        %v766 = vmul.f32 %v659, %v358
        %v767 = vmul.f32 %v660, %v358
        %v768 = vmul.f32 %v661, %v358
        %773 = vrot.lane.b32.xlu0 %v765, 108
        %v774 = vpop.permute.xlu0 %773
        %775 = vrot.lane.b32.xlu0 %v766, 108
        %v776 = vpop.permute.xlu0 %775
        %777 = vrot.lane.b32.xlu0 %v767, 108
        %v778 = vpop.permute.xlu0 %777
        %779 = vrot.lane.b32.xlu0 %v768, 108
        %v780 = vpop.permute.xlu0 %779
        %v781 = vsel %vm376, %v774, %v776
        %v782 = vsel %vm376, %v776, %v778
        %v783 = vsel %vm376, %v778, %v780
        %v787 = vadd.f32 %v762, %v781
        %v788 = vadd.f32 %v763, %v782
        %v789 = vadd.f32 %v764, %v783
        %v790 = vmul.f32 %v658, %v388
        %v791 = vmul.f32 %v659, %v388
        %v792 = vmul.f32 %v660, %v388
        %v793 = vmul.f32 %v661, %v388
        %798 = vrot.lane.b32.xlu0 %v790, 92
        %v799 = vpop.permute.xlu0 %798
        %800 = vrot.lane.b32.xlu0 %v791, 92
        %v801 = vpop.permute.xlu0 %800
        %802 = vrot.lane.b32.xlu0 %v792, 92
        %v803 = vpop.permute.xlu0 %802
        %804 = vrot.lane.b32.xlu0 %v793, 92
        %v805 = vpop.permute.xlu0 %804
        %v806 = vsel %vm406, %v799, %v801
        %v807 = vsel %vm406, %v801, %v803
        %v808 = vsel %vm406, %v803, %v805
        %v812 = vadd.f32 %v787, %v806
        %v813 = vadd.f32 %v788, %v807
        %v814 = vadd.f32 %v789, %v808
        %v815 = vmul.f32 %v658, %v418
        %v816 = vmul.f32 %v659, %v418
        %v817 = vmul.f32 %v660, %v418
        %v818 = vmul.f32 %v661, %v418
        %823 = vrot.lane.b32.xlu0 %v815, 91
        %v824 = vpop.permute.xlu0 %823
        %825 = vrot.lane.b32.xlu0 %v816, 91
        %v826 = vpop.permute.xlu0 %825
        %827 = vrot.lane.b32.xlu0 %v817, 91
        %v828 = vpop.permute.xlu0 %827
        %829 = vrot.lane.b32.xlu0 %v818, 91
        %v830 = vpop.permute.xlu0 %829
        %v831 = vsel %vm436, %v824, %v826
        %v832 = vsel %vm436, %v826, %v828
        %v833 = vsel %vm436, %v828, %v830
        %v837 = vadd.f32 %v812, %v831
        %v838 = vadd.f32 %v813, %v832
        %v839 = vadd.f32 %v814, %v833
        %v840 = vmul.f32 %v658, %v448
        %v841 = vmul.f32 %v659, %v448
        %v842 = vmul.f32 %v660, %v448
        %v843 = vmul.f32 %v661, %v448
        %848 = vrot.lane.b32.xlu0 %v840, 90
        %v849 = vpop.permute.xlu0 %848
        %850 = vrot.lane.b32.xlu0 %v841, 90
        %v851 = vpop.permute.xlu0 %850
        %852 = vrot.lane.b32.xlu0 %v842, 90
        %v853 = vpop.permute.xlu0 %852
        %854 = vrot.lane.b32.xlu0 %v843, 90
        %v855 = vpop.permute.xlu0 %854
        %v856 = vsel %vm466, %v849, %v851
        %v857 = vsel %vm466, %v851, %v853
        %v858 = vsel %vm466, %v853, %v855
        %v862 = vadd.f32 %v837, %v856
        %v863 = vadd.f32 %v838, %v857
        %v864 = vadd.f32 %v839, %v858
        %865 = vmatprep.subr.mxu0 0.0
        %866 = vmatpush1.msra.mxu0 0.0
        %867 = vmatprep.subr.mxu0 0.0
        %868 = vmatpush1.msra.mxu0 0.0
        %869 = vmatprep.subr.mxu0 0.0
        %870 = vmatpush1.msra.mxu0 0.0
        %871 = vmatprep.subr.mxu0 0.0
        %872 = vmatpush1.msra.mxu0 0.0
        %873 = vmatprep.subr.mxu0 0.0
        %874 = vmatpush1.msra.mxu0 0.0
        %875 = vmatprep.subr.mxu0 0.0
        %876 = vmatpush1.msra.mxu0 0.0
        %877 = vmatprep.subr.mxu0 0.0
        %878 = vmatpush1.msra.mxu0 0.0
        %879 = vmatprep.subr.mxu0 0.0
        %880 = vmatpush1.msra.mxu0 0.0
        %881 = vmatprep.subr.mxu0 0.0
        %882 = vmatpush1.msra.mxu0 0.0
        %883 = vmatprep.subr.mxu0 0.0
        %884 = vmatpush1.msra.mxu0 0.0
        %885 = vmatprep.subr.mxu0 0.0
        %886 = vmatpush1.msra.mxu0 0.0
        %887 = vmatprep.subr.mxu0 0.0
        %888 = vmatpush1.msra.mxu0 0.0
        %889 = vmatprep.subr.mxu0 0.0
        %890 = vmatpush1.msra.mxu0 0.0
        %891 = vmatprep.subr.mxu0 0.0
        %892 = vmatpush1.msra.mxu0 0.0
        %893 = vmatprep.subr.mxu0 0.0
        %894 = vmatpush1.msra.mxu0 0.0
        %895 = vmatprep.subr.mxu0 %v863
        %896 = vmatpush1.msra.mxu0 %v862
        %897 = vmatprep.subr.mxu0 0.0
        %898 = vmatpush2.msra.mxu0 0.0
        %899 = vmatprep.subr.mxu0 0.0
        %900 = vmatpush2.msra.mxu0 0.0
        %901 = vmatprep.subr.mxu0 0.0
        %902 = vmatpush2.msra.mxu0 0.0
        %903 = vmatprep.subr.mxu0 0.0
        %904 = vmatpush2.msra.mxu0 0.0
        %905 = vmatprep.subr.mxu0 0.0
        %906 = vmatpush2.msra.mxu0 0.0
        %907 = vmatprep.subr.mxu0 0.0
        %908 = vmatpush2.msra.mxu0 0.0
        %909 = vmatprep.subr.mxu0 0.0
        %910 = vmatpush2.msra.mxu0 0.0
        %911 = vmatprep.subr.mxu0 0.0
        %912 = vmatpush2.msra.mxu0 0.0
        %913 = vmatprep.subr.mxu0 0.0
        %914 = vmatpush2.msra.mxu0 0.0
        %915 = vmatprep.subr.mxu0 0.0
        %916 = vmatpush2.msra.mxu0 0.0
        %917 = vmatprep.subr.mxu0 0.0
        %918 = vmatpush2.msra.mxu0 0.0
        %919 = vmatprep.subr.mxu0 0.0
        %920 = vmatpush2.msra.mxu0 0.0
        %921 = vmatprep.subr.mxu0 0.0
        %922 = vmatpush2.msra.mxu0 0.0
        %923 = vmatprep.subr.mxu0 0.0
        %924 = vmatpush2.msra.mxu0 0.0
        %925 = vmatprep.subr.mxu0 0.0
        %926 = vmatpush2.msra.mxu0 0.0
        %927 = vmatprep.subr.mxu0 0.0
        %928 = vmatpush2.msra.mxu0 0.0
        %929 = vmatprep.mubr.f32.mxu0 0.0
        %930 = vmatmul.mubr.f32.gmra.mxu0 %v488
        %v931 = vpop.f32.mrf.mxu0
        %v932 = vadd.f32 %v479, %v931
        %v933 = vpop.f32.mrf.mxu0
        %v934 = vadd.f32 %v479, %v933
        %935 = vmatprep.mubr.f32.mxu0 0.0
        %936 = vmatmul.mubr.f32.gmra.mxu0 %v491
        %v937 = vpop.f32.mrf.mxu0
        %v938 = vadd.f32 %v484, %v937
        %v939 = vpop.f32.mrf.mxu0
        %v940 = vadd.f32 %v484, %v939
        %941 = vdwg.mxu0
        %942 = vmatprep.subr.mxu0 0.0
        %943 = vmatpush1.msra.mxu0 0.0
        %944 = vmatprep.subr.mxu0 0.0
        %945 = vmatpush1.msra.mxu0 0.0
        %946 = vmatprep.subr.mxu0 0.0
        %947 = vmatpush1.msra.mxu0 0.0
        %948 = vmatprep.subr.mxu0 0.0
        %949 = vmatpush1.msra.mxu0 0.0
        %950 = vmatprep.subr.mxu0 0.0
        %951 = vmatpush1.msra.mxu0 0.0
        %952 = vmatprep.subr.mxu0 0.0
        %953 = vmatpush1.msra.mxu0 0.0
        %954 = vmatprep.subr.mxu0 0.0
        %955 = vmatpush1.msra.mxu0 0.0
        %956 = vmatprep.subr.mxu0 0.0
        %957 = vmatpush1.msra.mxu0 0.0
        %958 = vmatprep.subr.mxu0 0.0
        %959 = vmatpush1.msra.mxu0 0.0
        %960 = vmatprep.subr.mxu0 0.0
        %961 = vmatpush1.msra.mxu0 0.0
        %962 = vmatprep.subr.mxu0 0.0
        %963 = vmatpush1.msra.mxu0 0.0
        %964 = vmatprep.subr.mxu0 0.0
        %965 = vmatpush1.msra.mxu0 0.0
        %966 = vmatprep.subr.mxu0 0.0
        %967 = vmatpush1.msra.mxu0 0.0
        %968 = vmatprep.subr.mxu0 0.0
        %969 = vmatpush1.msra.mxu0 0.0
        %970 = vmatprep.subr.mxu0 0.0
        %971 = vmatpush1.msra.mxu0 0.0
        %972 = vmatprep.subr.mxu0 0.0
        %973 = vmatpush1.msra.mxu0 %v864
        %974 = vmatprep.subr.mxu0 0.0
        %975 = vmatpush2.msra.mxu0 0.0
        %976 = vmatprep.subr.mxu0 0.0
        %977 = vmatpush2.msra.mxu0 0.0
        %978 = vmatprep.subr.mxu0 0.0
        %979 = vmatpush2.msra.mxu0 0.0
        %980 = vmatprep.subr.mxu0 0.0
        %981 = vmatpush2.msra.mxu0 0.0
        %982 = vmatprep.subr.mxu0 0.0
        %983 = vmatpush2.msra.mxu0 0.0
        %984 = vmatprep.subr.mxu0 0.0
        %985 = vmatpush2.msra.mxu0 0.0
        %986 = vmatprep.subr.mxu0 0.0
        %987 = vmatpush2.msra.mxu0 0.0
        %988 = vmatprep.subr.mxu0 0.0
        %989 = vmatpush2.msra.mxu0 0.0
        %990 = vmatprep.subr.mxu0 0.0
        %991 = vmatpush2.msra.mxu0 0.0
        %992 = vmatprep.subr.mxu0 0.0
        %993 = vmatpush2.msra.mxu0 0.0
        %994 = vmatprep.subr.mxu0 0.0
        %995 = vmatpush2.msra.mxu0 0.0
        %996 = vmatprep.subr.mxu0 0.0
        %997 = vmatpush2.msra.mxu0 0.0
        %998 = vmatprep.subr.mxu0 0.0
        %999 = vmatpush2.msra.mxu0 0.0
        %1000 = vmatprep.subr.mxu0 0.0
        %1001 = vmatpush2.msra.mxu0 0.0
        %1002 = vmatprep.subr.mxu0 0.0
        %1003 = vmatpush2.msra.mxu0 0.0
        %1004 = vmatprep.subr.mxu0 0.0
        %1005 = vmatpush2.msra.mxu0 0.0
        %1006 = vmatprep.mubr.f32.mxu0 0.0
        %1007 = vmatmul.mubr.f32.gmra.mxu0 %v488
        %v1008 = vpop.f32.mrf.mxu0
        %v1009 = vadd.f32 %v479, %v1008
        %v1010 = vpop.f32.mrf.mxu0
        %1011 = vmatprep.mubr.f32.mxu0 0.0
        %1012 = vmatmul.mubr.f32.gmra.mxu0 %v491
        %v1013 = vpop.f32.mrf.mxu0
        %v1014 = vadd.f32 %v484, %v1013
        %v1015 = vpop.f32.mrf.mxu0
        %1016 = vdwg.mxu0
        %v1017 = vmax.f32 %v932, 0.0
        %v1018 = vmax.f32 %v934, 0.0
        %v1019 = vmax.f32 %v1009, 0.0
        %v1020 = vmax.f32 %v938, 0.0
        %v1021 = vmax.f32 %v940, 0.0
        %v1022 = vmax.f32 %v1014, 0.0
        %s1023 = scalar_lea.vmem %s216, 48 [#allocation5]
        %1024 = vst [vmem:[%s1023] sm:$0xff] %v1017
        %1025 = vst [vmem:[%s1023 + $0x8] sm:$0xff] %v1018
        %1026 = vst [vmem:[%s1023 + $0x10] sm:$0xff] %v1019
        %1027 = vst [vmem:[%s1023 + $0x18] sm:$0xff] %v1020
        %1028 = vst [vmem:[%s1023 + $0x20] sm:$0xff] %v1021
        %1029 = vst [vmem:[%s1023 + $0x28] sm:$0xff] %v1022
        %s1030 = sand.u32 %s118, 1
        %s1031 = scalar_lea.sflag [#allocation4], %s1030
        %s1032 = sand.u32 %s118, 1
        %s1033 = smul.addr %s1032, 96
        %s1034 = scalar_lea.vmem [#allocation5], %s1033
        // Predicated region
        $region41: #{tpu_custom_call.1} parent=35 // pred_check
          %p1035 = pneg %p128
        $region42: #{tpu_custom_call.1} parent=35 // pred_check_branch
          %1037 = sbr.rel (%p1035) target = $region44
        $region43: #{tpu_custom_call.1} parent=35 // pred_region
          %s1038 = smul.u32 2, %s21
          %s1040 = ssub.s32 1536, 1536
          %1041 = vsyncadd %s1031, %s1040
          %s1042 = smul.addr %s1038, 6
          %s1043 = smul.addr %s1042, 128
          %s1044 = scalar_lea.hbm %s4, %s1043
          %s1045 = sshll.u32 %s1034, 4
          %s1046 = int_to_ptr.vmem [resolvable:$true] %s1045
          %1051 = dma.vmem_to_hbm [thread:$0]  %s1046, 1536, %s1044, %s1031, 384, 384, 24
        $region44: #{tpu_custom_call.1} parent=35 // pred_fallthru
          _
      $region36: #{tpu_custom_call.1} parent=5 // pred_fallthru
        _
      %p1052 = scmp.le.s32.totalorder 2, %s16
      // Predicated region
      $region45: #{tpu_custom_call.1} parent=5 // pred_check
        %p1053 = pneg %p1052
      $region46: #{tpu_custom_call.1} parent=5 // pred_check_branch
        %1055 = sbr.rel (%p1053) target = $region48
      $region47: #{tpu_custom_call.1} parent=5 // pred_region
        %s1056 = ssub.s32 %s16, 2
        // Predicated region
        $region49: #{tpu_custom_call.1} parent=47 // pred_check
          %p1057 = pneg %p134
        $region50: #{tpu_custom_call.1} parent=47 // pred_check_branch
          %1059 = sbr.rel (%p1057) target = $region52
        $region51: #{tpu_custom_call.1} parent=47 // pred_region
          %s1060 = sand.u32 %s119, 1
          %s1061 = scalar_lea.sflag [#allocation4], %s1060
          %s1062 = sand.u32 %s119, 1
          %s1063 = smul.addr %s1062, 96
          %s1064 = scalar_lea.vmem [#allocation5], %s1063
          %1065 = dma.done %s1061, 1536
        $region52: #{tpu_custom_call.1} parent=47 // pred_fallthru
          _
      $region48: #{tpu_custom_call.1} parent=5 // pred_fallthru
        _
    $region6: #{tpu_custom_call.1} parent=1 // loop_footer
      %s20 = sadd.s32 1, %s16
    $region7: #{tpu_custom_call.1} parent=1 // loop_footer_branch
      %15 = sbr.rel target = $region3
    $region8: #{tpu_custom_call.1} parent=1 // loop_exit
      _
    %1066 = vsyncpa [#allocation3], 1
    %s1067 = scalar_lea.sflag [#allocation3], 1
    %1068 = vsyncpa %s1067, 1
    %1069 = vsyncpa [#allocation4], 1
    %s1070 = scalar_lea.sflag [#allocation4], 1
    %1071 = vsyncpa %s1070, 1

</llo_original>
